<compile_context>
chip_gen: v7x
topology: tpu7x:2x2x1
jax: 0.10.0
libtpu: 0.0.40
codegen_flags: <defaults>
</compile_context>

<pallas_src>
import jax
import jax.numpy as jnp
from jax.experimental import pallas as pl
from jax.experimental.pallas import tpu as pltpu


def _outconv_kernel(x_ref, w_ref, b_ref, o_ref):
    """Fused 1x1 conv + bias + sigmoid on one (batch, spatial) tile.

    x_ref: (1, Cin, S, L)  VMEM  — pixels dense on sublanes+lanes
    w_ref: (Cout, Cin)     SMEM  — scalar weights
    b_ref: (Cout,)         SMEM  — scalar bias
    o_ref: (1, Cout, S, L) VMEM
    """
    cout, cin = w_ref.shape
    for c in range(cout):                       # static unroll: Cout is tiny
        acc = x_ref[0, 0].astype(jnp.float32) * w_ref[c, 0]
        for k in range(1, cin):                 # static unroll: Cin is tiny
            acc = acc + x_ref[0, k].astype(jnp.float32) * w_ref[c, k]
        acc = acc + b_ref[c]
        # sigmoid(x) = 1 / (1 + exp(-x)); exp and approx reciprocal both issue
        # on the EUP slot, keeping the VPU free.  Accuracy cost ~1e-4.
        sig = pl.reciprocal(1.0 + jnp.exp(-acc), approx=True)
        o_ref[0, c] = sig.astype(o_ref.dtype)


def outconv_pallas(x_nchw, weight, bias, *, sublane_tile=2048):
    """1x1 conv + sigmoid, matching nn.Conv2d(in_ch, out_ch, 1) + nn.Sigmoid().

    x_nchw:  (N, Cin, H, W)      float32
    weight:  (Cout, Cin, 1, 1)   (PyTorch Conv2d layout)
    bias:    (Cout,)
    returns: (N, Cout, H, W)
    """
    N, Cin, H, W = x_nchw.shape
    Cout = weight.shape[0]
    HW = H * W
    out_dtype = x_nchw.dtype

    # Lane-dense spatial view: (N, Cin, H, W) -> (N, Cin, R, L) is a free
    # reshape (contiguous trailing-dim split), no HBM relayout.
    if HW % 128 == 0:
        L = 128
        R = HW // 128
    else:
        # Fallback for odd spatial sizes: one full row per block (legal because
        # the block dims equal the full array dims).
        L = HW
        R = 1

    # Spatial sublane tile: big enough that each grid step moves multiple MB.
    s_tile = max(8, (sublane_tile // 8) * 8)    # keep a multiple of 8
    S = R if R <= s_tile else s_tile

    x4 = x_nchw.reshape(N, Cin, R, L)           # free view of NCHW
    w2 = weight.reshape(Cout, Cin)              # (Cout, Cin), no transpose
    b1 = bias.reshape(Cout)

    grid = (N, pl.cdiv(R, S))                   # no input padding needed

    cost = pl.CostEstimate(
        flops=2 * N * HW * Cin * Cout,
        transcendentals=N * HW * Cout,
        bytes_accessed=4 * (N * HW * Cin + N * HW * Cout + Cout * Cin + Cout),
    )

    out4 = pl.pallas_call(
        _outconv_kernel,
        out_shape=jax.ShapeDtypeStruct((N, Cout, R, L), out_dtype),
        grid=grid,
        in_specs=[
            pl.BlockSpec((1, Cin, S, L), lambda n, s: (n, 0, s, 0)),
            pl.BlockSpec(memory_space=pltpu.MemorySpace.SMEM),   # weights
            pl.BlockSpec(memory_space=pltpu.MemorySpace.SMEM),   # bias
        ],
        out_specs=pl.BlockSpec((1, Cout, S, L), lambda n, s: (n, 0, s, 0)),
        compiler_params=pltpu.CompilerParams(
            dimension_semantics=("parallel", "parallel")),
        cost_estimate=cost,
    )(x4, w2, b1)

    # Free reshape back to NCHW.
    return out4.reshape(N, Cout, H, W)


def outconv_reference(x_nchw, weight, bias):
    """Pure-JAX reference matching PyTorch nn.Conv2d(k=1) + Sigmoid."""
    w_mat = weight.reshape(weight.shape[0], weight.shape[1])  # (Cout, Cin)
    y = jnp.einsum("nchw,oc->nohw", x_nchw, w_mat) + bias[None, :, None, None]
    return jax.nn.sigmoid(y)


if __name__ == "__main__":
    key = jax.random.PRNGKey(0)

    def make_case(k, N, Cin, Cout, H, W):
        kx, kw, kb = jax.random.split(k, 3)
        x = jax.random.normal(kx, (N, Cin, H, W), dtype=jnp.float32)
        bound = 1.0 / (Cin ** 0.5)
        w = jax.random.uniform(kw, (Cout, Cin, 1, 1), jnp.float32, -bound, bound)
        b = jax.random.uniform(kb, (Cout,), jnp.float32, -bound, bound)
        return x, w, b

    cases = [
        (2, 4, 3, 16, 16),   # main small case (HW divisible by 128)
        (1, 3, 1, 32, 24),   # different channel counts
        (2, 4, 3, 10, 10),   # HW not divisible by 128 -> full-row fallback path
    ]
    keys = jax.random.split(key, len(cases))
    for k_i, (N, Cin, Cout, H, W) in zip(keys, cases):
        x, weight, bias = make_case(k_i, N, Cin, Cout, H, W)
        out = jax.block_until_ready(outconv_pallas(x, weight, bias))
        ref = outconv_reference(x, weight, bias)
        assert out.shape == (N, Cout, H, W)
        # approx-reciprocal sigmoid costs ~1e-4 absolute accuracy; keep margin.
        assert jnp.allclose(out, ref, atol=2e-3, rtol=2e-3), "mismatch vs reference"

    print("KERNEL_OK")
</pallas_src>

<mosaic_0001>
module attributes {stable_mosaic.version = 11 : i64} {
  func.func @_outconv_kernel(%arg0: i32, %arg1: i32, %arg2: memref<1x4x2x128xf32, #tpu.memory_space<vmem>>, %arg3: memref<3x4xf32, #tpu.memory_space<smem>>, %arg4: memref<3xf32, #tpu.memory_space<smem>>, %arg5: memref<1x3x2x128xf32, #tpu.memory_space<vmem>>) attributes {dimension_semantics = [#tpu.dimension_semantics<parallel>, #tpu.dimension_semantics<parallel>], iteration_bounds = array<i64: 2, 1>, scalar_prefetch = 0 : i64, scratch_operands = 0 : i64, tpu.core_type = #tpu.core_type<tc>, window_params = [{transform_indices = @transform_0, window_bounds = array<i64: 1, 4, 2, 128>}, {transform_indices = @transform_1, window_bounds = array<i64: 3, 4>}, {transform_indices = @transform_2, window_bounds = array<i64: 3>}, {transform_indices = @transform_3, window_bounds = array<i64: 1, 3, 2, 128>}]} {
    %c0 = arith.constant 0 : index
    %c0_0 = arith.constant 0 : index
    %c0_1 = arith.constant 0 : index
    %c0_2 = arith.constant 0 : index
    %0 = vector.load %arg2[%c0, %c0_0, %c0_1, %c0_2] : memref<1x4x2x128xf32, #tpu.memory_space<vmem>>, vector<1x1x2x128xf32>
    %1 = vector.shape_cast %0 : vector<1x1x2x128xf32> to vector<2x128xf32>
    %c0_3 = arith.constant 0 : index
    %c0_4 = arith.constant 0 : index
    %2 = memref.load %arg3[%c0_3, %c0_4] : memref<3x4xf32, #tpu.memory_space<smem>>
    %3 = vector.broadcast %2 : f32 to vector<2x128xf32>
    %4 = arith.mulf %1, %3 : vector<2x128xf32>
    %c0_5 = arith.constant 0 : index
    %c1 = arith.constant 1 : index
    %c0_6 = arith.constant 0 : index
    %c0_7 = arith.constant 0 : index
    %5 = vector.load %arg2[%c0_5, %c1, %c0_6, %c0_7] : memref<1x4x2x128xf32, #tpu.memory_space<vmem>>, vector<1x1x2x128xf32>
    %6 = vector.shape_cast %5 : vector<1x1x2x128xf32> to vector<2x128xf32>
    %c0_8 = arith.constant 0 : index
    %c1_9 = arith.constant 1 : index
    %7 = memref.load %arg3[%c0_8, %c1_9] : memref<3x4xf32, #tpu.memory_space<smem>>
    %8 = vector.broadcast %7 : f32 to vector<2x128xf32>
    %9 = arith.mulf %6, %8 : vector<2x128xf32>
    %10 = arith.addf %4, %9 : vector<2x128xf32>
    %c0_10 = arith.constant 0 : index
    %c2 = arith.constant 2 : index
    %c0_11 = arith.constant 0 : index
    %c0_12 = arith.constant 0 : index
    %11 = vector.load %arg2[%c0_10, %c2, %c0_11, %c0_12] : memref<1x4x2x128xf32, #tpu.memory_space<vmem>>, vector<1x1x2x128xf32>
    %12 = vector.shape_cast %11 : vector<1x1x2x128xf32> to vector<2x128xf32>
    %c0_13 = arith.constant 0 : index
    %c2_14 = arith.constant 2 : index
    %13 = memref.load %arg3[%c0_13, %c2_14] : memref<3x4xf32, #tpu.memory_space<smem>>
    %14 = vector.broadcast %13 : f32 to vector<2x128xf32>
    %15 = arith.mulf %12, %14 : vector<2x128xf32>
    %16 = arith.addf %10, %15 : vector<2x128xf32>
    %c0_15 = arith.constant 0 : index
    %c3 = arith.constant 3 : index
    %c0_16 = arith.constant 0 : index
    %c0_17 = arith.constant 0 : index
    %17 = vector.load %arg2[%c0_15, %c3, %c0_16, %c0_17] : memref<1x4x2x128xf32, #tpu.memory_space<vmem>>, vector<1x1x2x128xf32>
    %18 = vector.shape_cast %17 : vector<1x1x2x128xf32> to vector<2x128xf32>
    %c0_18 = arith.constant 0 : index
    %c3_19 = arith.constant 3 : index
    %19 = memref.load %arg3[%c0_18, %c3_19] : memref<3x4xf32, #tpu.memory_space<smem>>
    %20 = vector.broadcast %19 : f32 to vector<2x128xf32>
    %21 = arith.mulf %18, %20 : vector<2x128xf32>
    %22 = arith.addf %16, %21 : vector<2x128xf32>
    %c0_20 = arith.constant 0 : index
    %23 = memref.load %arg4[%c0_20] : memref<3xf32, #tpu.memory_space<smem>>
    %24 = vector.broadcast %23 : f32 to vector<2x128xf32>
    %25 = arith.addf %22, %24 : vector<2x128xf32>
    %cst = arith.constant 0.000000e+00 : f32
    %26 = vector.broadcast %cst : f32 to vector<2x128xf32>
    %27 = arith.subf %26, %25 : vector<2x128xf32>
    %28 = math.exp %27 : vector<2x128xf32>
    %cst_21 = arith.constant 1.000000e+00 : f32
    %29 = vector.broadcast %cst_21 : f32 to vector<2x128xf32>
    %30 = arith.addf %29, %28 : vector<2x128xf32>
    %31 = tpu.reciprocal %30 {approx = true} : vector<2x128xf32> -> vector<2x128xf32>
    %c0_22 = arith.constant 0 : index
    %c0_23 = arith.constant 0 : index
    %c0_24 = arith.constant 0 : index
    %c0_25 = arith.constant 0 : index
    %32 = vector.load %arg5[%c0_22, %c0_23, %c0_24, %c0_25] : memref<1x3x2x128xf32, #tpu.memory_space<vmem>>, vector<1x1x2x128xf32>
    %33 = vector.shape_cast %32 : vector<1x1x2x128xf32> to vector<2x128xf32>
    %34 = vector.shape_cast %31 : vector<2x128xf32> to vector<1x1x2x128xf32>
    tpu.vector_store %arg5[%c0_22, %c0_23, %c0_24, %c0_25], %34 {strides = array<i32>} : memref<1x3x2x128xf32, #tpu.memory_space<vmem>>, vector<1x1x2x128xf32>,
    %c0_26 = arith.constant 0 : index
    %c0_27 = arith.constant 0 : index
    %c0_28 = arith.constant 0 : index
    %c0_29 = arith.constant 0 : index
    %35 = vector.load %arg2[%c0_26, %c0_27, %c0_28, %c0_29] : memref<1x4x2x128xf32, #tpu.memory_space<vmem>>, vector<1x1x2x128xf32>
    %36 = vector.shape_cast %35 : vector<1x1x2x128xf32> to vector<2x128xf32>
    %c1_30 = arith.constant 1 : index
    %c0_31 = arith.constant 0 : index
    %37 = memref.load %arg3[%c1_30, %c0_31] : memref<3x4xf32, #tpu.memory_space<smem>>
    %38 = vector.broadcast %37 : f32 to vector<2x128xf32>
    %39 = arith.mulf %36, %38 : vector<2x128xf32>
    %c0_32 = arith.constant 0 : index
    %c1_33 = arith.constant 1 : index
    %c0_34 = arith.constant 0 : index
    %c0_35 = arith.constant 0 : index
    %40 = vector.load %arg2[%c0_32, %c1_33, %c0_34, %c0_35] : memref<1x4x2x128xf32, #tpu.memory_space<vmem>>, vector<1x1x2x128xf32>
    %41 = vector.shape_cast %40 : vector<1x1x2x128xf32> to vector<2x128xf32>
    %c1_36 = arith.constant 1 : index
    %c1_37 = arith.constant 1 : index
    %42 = memref.load %arg3[%c1_36, %c1_37] : memref<3x4xf32, #tpu.memory_space<smem>>
    %43 = vector.broadcast %42 : f32 to vector<2x128xf32>
    %44 = arith.mulf %41, %43 : vector<2x128xf32>
    %45 = arith.addf %39, %44 : vector<2x128xf32>
    %c0_38 = arith.constant 0 : index
    %c2_39 = arith.constant 2 : index
    %c0_40 = arith.constant 0 : index
    %c0_41 = arith.constant 0 : index
    %46 = vector.load %arg2[%c0_38, %c2_39, %c0_40, %c0_41] : memref<1x4x2x128xf32, #tpu.memory_space<vmem>>, vector<1x1x2x128xf32>
    %47 = vector.shape_cast %46 : vector<1x1x2x128xf32> to vector<2x128xf32>
    %c1_42 = arith.constant 1 : index
    %c2_43 = arith.constant 2 : index
    %48 = memref.load %arg3[%c1_42, %c2_43] : memref<3x4xf32, #tpu.memory_space<smem>>
    %49 = vector.broadcast %48 : f32 to vector<2x128xf32>
    %50 = arith.mulf %47, %49 : vector<2x128xf32>
    %51 = arith.addf %45, %50 : vector<2x128xf32>
    %c0_44 = arith.constant 0 : index
    %c3_45 = arith.constant 3 : index
    %c0_46 = arith.constant 0 : index
    %c0_47 = arith.constant 0 : index
    %52 = vector.load %arg2[%c0_44, %c3_45, %c0_46, %c0_47] : memref<1x4x2x128xf32, #tpu.memory_space<vmem>>, vector<1x1x2x128xf32>
    %53 = vector.shape_cast %52 : vector<1x1x2x128xf32> to vector<2x128xf32>
    %c1_48 = arith.constant 1 : index
    %c3_49 = arith.constant 3 : index
    %54 = memref.load %arg3[%c1_48, %c3_49] : memref<3x4xf32, #tpu.memory_space<smem>>
    %55 = vector.broadcast %54 : f32 to vector<2x128xf32>
    %56 = arith.mulf %53, %55 : vector<2x128xf32>
    %57 = arith.addf %51, %56 : vector<2x128xf32>
    %c1_50 = arith.constant 1 : index
    %58 = memref.load %arg4[%c1_50] : memref<3xf32, #tpu.memory_space<smem>>
    %59 = vector.broadcast %58 : f32 to vector<2x128xf32>
    %60 = arith.addf %57, %59 : vector<2x128xf32>
    %cst_51 = arith.constant 0.000000e+00 : f32
    %61 = vector.broadcast %cst_51 : f32 to vector<2x128xf32>
    %62 = arith.subf %61, %60 : vector<2x128xf32>
    %63 = math.exp %62 : vector<2x128xf32>
    %cst_52 = arith.constant 1.000000e+00 : f32
    %64 = vector.broadcast %cst_52 : f32 to vector<2x128xf32>
    %65 = arith.addf %64, %63 : vector<2x128xf32>
    %66 = tpu.reciprocal %65 {approx = true} : vector<2x128xf32> -> vector<2x128xf32>
    %c0_53 = arith.constant 0 : index
    %c1_54 = arith.constant 1 : index
    %c0_55 = arith.constant 0 : index
    %c0_56 = arith.constant 0 : index
    %67 = vector.load %arg5[%c0_53, %c1_54, %c0_55, %c0_56] : memref<1x3x2x128xf32, #tpu.memory_space<vmem>>, vector<1x1x2x128xf32>
    %68 = vector.shape_cast %67 : vector<1x1x2x128xf32> to vector<2x128xf32>
    %69 = vector.shape_cast %66 : vector<2x128xf32> to vector<1x1x2x128xf32>
    tpu.vector_store %arg5[%c0_53, %c1_54, %c0_55, %c0_56], %69 {strides = array<i32>} : memref<1x3x2x128xf32, #tpu.memory_space<vmem>>, vector<1x1x2x128xf32>,
    %c0_57 = arith.constant 0 : index
    %c0_58 = arith.constant 0 : index
    %c0_59 = arith.constant 0 : index
    %c0_60 = arith.constant 0 : index
    %70 = vector.load %arg2[%c0_57, %c0_58, %c0_59, %c0_60] : memref<1x4x2x128xf32, #tpu.memory_space<vmem>>, vector<1x1x2x128xf32>
    %71 = vector.shape_cast %70 : vector<1x1x2x128xf32> to vector<2x128xf32>
    %c2_61 = arith.constant 2 : index
    %c0_62 = arith.constant 0 : index
    %72 = memref.load %arg3[%c2_61, %c0_62] : memref<3x4xf32, #tpu.memory_space<smem>>
    %73 = vector.broadcast %72 : f32 to vector<2x128xf32>
    %74 = arith.mulf %71, %73 : vector<2x128xf32>
    %c0_63 = arith.constant 0 : index
    %c1_64 = arith.constant 1 : index
    %c0_65 = arith.constant 0 : index
    %c0_66 = arith.constant 0 : index
    %75 = vector.load %arg2[%c0_63, %c1_64, %c0_65, %c0_66] : memref<1x4x2x128xf32, #tpu.memory_space<vmem>>, vector<1x1x2x128xf32>
    %76 = vector.shape_cast %75 : vector<1x1x2x128xf32> to vector<2x128xf32>
    %c2_67 = arith.constant 2 : index
    %c1_68 = arith.constant 1 : index
    %77 = memref.load %arg3[%c2_67, %c1_68] : memref<3x4xf32, #tpu.memory_space<smem>>
    %78 = vector.broadcast %77 : f32 to vector<2x128xf32>
    %79 = arith.mulf %76, %78 : vector<2x128xf32>
    %80 = arith.addf %74, %79 : vector<2x128xf32>
    %c0_69 = arith.constant 0 : index
    %c2_70 = arith.constant 2 : index
    %c0_71 = arith.constant 0 : index
    %c0_72 = arith.constant 0 : index
    %81 = vector.load %arg2[%c0_69, %c2_70, %c0_71, %c0_72] : memref<1x4x2x128xf32, #tpu.memory_space<vmem>>, vector<1x1x2x128xf32>
    %82 = vector.shape_cast %81 : vector<1x1x2x128xf32> to vector<2x128xf32>
    %c2_73 = arith.constant 2 : index
    %c2_74 = arith.constant 2 : index
    %83 = memref.load %arg3[%c2_73, %c2_74] : memref<3x4xf32, #tpu.memory_space<smem>>
    %84 = vector.broadcast %83 : f32 to vector<2x128xf32>
    %85 = arith.mulf %82, %84 : vector<2x128xf32>
    %86 = arith.addf %80, %85 : vector<2x128xf32>
    %c0_75 = arith.constant 0 : index
    %c3_76 = arith.constant 3 : index
    %c0_77 = arith.constant 0 : index
    %c0_78 = arith.constant 0 : index
    %87 = vector.load %arg2[%c0_75, %c3_76, %c0_77, %c0_78] : memref<1x4x2x128xf32, #tpu.memory_space<vmem>>, vector<1x1x2x128xf32>
    %88 = vector.shape_cast %87 : vector<1x1x2x128xf32> to vector<2x128xf32>
    %c2_79 = arith.constant 2 : index
    %c3_80 = arith.constant 3 : index
    %89 = memref.load %arg3[%c2_79, %c3_80] : memref<3x4xf32, #tpu.memory_space<smem>>
    %90 = vector.broadcast %89 : f32 to vector<2x128xf32>
    %91 = arith.mulf %88, %90 : vector<2x128xf32>
    %92 = arith.addf %86, %91 : vector<2x128xf32>
    %c2_81 = arith.constant 2 : index
    %93 = memref.load %arg4[%c2_81] : memref<3xf32, #tpu.memory_space<smem>>
    %94 = vector.broadcast %93 : f32 to vector<2x128xf32>
    %95 = arith.addf %92, %94 : vector<2x128xf32>
    %cst_82 = arith.constant 0.000000e+00 : f32
    %96 = vector.broadcast %cst_82 : f32 to vector<2x128xf32>
    %97 = arith.subf %96, %95 : vector<2x128xf32>
    %98 = math.exp %97 : vector<2x128xf32>
    %cst_83 = arith.constant 1.000000e+00 : f32
    %99 = vector.broadcast %cst_83 : f32 to vector<2x128xf32>
    %100 = arith.addf %99, %98 : vector<2x128xf32>
    %101 = tpu.reciprocal %100 {approx = true} : vector<2x128xf32> -> vector<2x128xf32>
    %c0_84 = arith.constant 0 : index
    %c2_85 = arith.constant 2 : index
    %c0_86 = arith.constant 0 : index
    %c0_87 = arith.constant 0 : index
    %102 = vector.load %arg5[%c0_84, %c2_85, %c0_86, %c0_87] : memref<1x3x2x128xf32, #tpu.memory_space<vmem>>, vector<1x1x2x128xf32>
    %103 = vector.shape_cast %102 : vector<1x1x2x128xf32> to vector<2x128xf32>
    %104 = vector.shape_cast %101 : vector<2x128xf32> to vector<1x1x2x128xf32>
    tpu.vector_store %arg5[%c0_84, %c2_85, %c0_86, %c0_87], %104 {strides = array<i32>} : memref<1x3x2x128xf32, #tpu.memory_space<vmem>>, vector<1x1x2x128xf32>,
    return
  }
  func.func @transform_0(%arg0: i32, %arg1: i32) -> (i32, i32, i32, i32) {
    %c0_i32 = arith.constant 0 : i32
    %c0_i32_0 = arith.constant 0 : i32
    %c0_i32_1 = arith.constant 0 : i32
    return %arg0, %c0_i32, %arg1, %c0_i32_0 : i32, i32, i32, i32
  }
  func.func @transform_1(%arg0: i32, %arg1: i32) -> (i32, i32) {
    %c0_i32 = arith.constant 0 : i32
    %c0_i32_0 = arith.constant 0 : i32
    %c0_i32_1 = arith.constant 0 : i32
    return %c0_i32, %c0_i32_0 : i32, i32
  }
  func.func @transform_2(%arg0: i32, %arg1: i32) -> i32 {
    %c0_i32 = arith.constant 0 : i32
    %c0_i32_0 = arith.constant 0 : i32
    return %c0_i32 : i32
  }
  func.func @transform_3(%arg0: i32, %arg1: i32) -> (i32, i32, i32, i32) {
    %c0_i32 = arith.constant 0 : i32
    %c0_i32_0 = arith.constant 0 : i32
    %c0_i32_1 = arith.constant 0 : i32
    return %arg0, %c0_i32, %arg1, %c0_i32_0 : i32, i32, i32, i32
  }
}

</mosaic_0001>

<llo_original>
// kernel: tpu_custom_call.1
$region0: #{tpu_custom_call.1}
  #allocation0 [shape = 'u32[]', space=smem, size = 0x4, offset = 0x4, fixed_abs, tag = 'smem constant byte address 0x4 - core index']
  #allocation1 [shape = 'u32[144,128]{1,0:T(1,128)}', space=vmem, size = 0x12000, scoped, tag = 'internal scratch']
  %s0 = inlined_call_operand.hbm [shape: f32[2,4,2,128], index: 0, kind: input, shape index: {}]
  %s1 = inlined_call_operand.hbm [shape: f32[3,4], index: 1, kind: input, shape index: {}]
  %s2 = inlined_call_operand.vmem [shape: f32[3], index: 2, kind: input, shape index: {}]
  %s3 = inlined_call_operand.hbm [shape: f32[2,3,2,128], index: 3, kind: output, shape index: {}]
  %s4 = sld [smem:[#allocation0]]
  $region57: #{tpu_custom_call.1} parent=0
    _
  %s6 = ssub.s32 1, %s4
  %s7 = scalar_select 0, %s6, %s4
  $region1: #{tpu_custom_call.1} parent=0
    #allocation2 [shape = 'u8[8192]{0}', space=vmem, size = 0x2000, scoped, tag = 'input window, operand 0']
    #allocation3 [shape = 's32[2]{0}', space=sflag, size = 0x8, scoped, tag = 'scoped memory for tpu_custom_call.1']
    #allocation4 [shape = 's32[2]{0}', space=sflag, size = 0x8, scoped, tag = 'scoped memory for tpu_custom_call.1']
    #allocation5 [shape = 's32[2]{0}', space=sflag, size = 0x8, scoped, tag = 'scoped memory for tpu_custom_call.1']
    #allocation6 [shape = 's32[2]{0}', space=sflag, size = 0x8, scoped, tag = 'scoped memory for tpu_custom_call.1']
    #allocation7 [shape = 'u8[2048]{0}', space=smem, size = 0x800, scoped, tag = 'input window, operand 1, single buffered']
    #allocation8 [shape = 'u8[512]{0}', space=smem, size = 0x200, scoped, tag = 'input window, operand 2, single buffered']
    #allocation9 [shape = 'u8[6144]{0}', space=vmem, size = 0x1800, scoped, tag = 'output window, operand 0']
    %8 = vsyncpa [#allocation3], 0
    %s9 = scalar_lea.sflag [#allocation3], 1
    %10 = vsyncpa %s9, 0
    %11 = vsyncpa [#allocation5], 0
    %12 = vsyncpa [#allocation6], 0
    %13 = vsyncpa [#allocation4], 0
    %s14 = scalar_lea.sflag [#allocation4], 1
    %15 = vsyncpa %s14, 0
    loop: start=0, step=1, limit=4
    $region2: #{tpu_custom_call.1} parent=1 // loop_pre_header
      _
    $region3: #{tpu_custom_call.1} parent=1 // loop_header
      %s17 = sphi 0, %s21
      %p18 = scmp.ge.s32.totalorder %s17, 4
      %s24 = sphi 0, %s36
      %s25 = sphi 0, %s32
      %s26 = sphi 0, %s24
      %s27 = sphi 0, %s25
      %s28 = sphi 0, %s26
      %s29 = sphi 0, %s27
      %s41 = sphi 0, %s43
      %s44 = sphi 0, %s41
      %s45 = sphi 0, %s44
      %s61 = sphi 0, %s45
      %s65 = sphi 0, %s65
      %s67 = sphi 0, %s65
      %s68 = sphi 0, %s67
      %s82 = sphi 0, %s68
      %s86 = sphi 0, %s86
      %s88 = sphi 0, %s86
      %s89 = sphi 0, %s88
      %s103 = sphi 0, %s89
      %s111 = sphi 0, %s113
      %s114 = sphi 0, %s111
      %s115 = sphi 0, %s114
      %s131 = sphi 0, %s115
    $region4: #{tpu_custom_call.1} parent=1 // loop_header_branch
      %20 = sbr.rel (%p18) target = $region8
    $region5: #{tpu_custom_call.1} parent=1 // loop_body
      %s22 = ssub.s32 %s17, 1
      %s23 = ssub.s32 %s17, 2
      %s30 = sadd.s32 1, %s25
      %p31 = scmp.ge.s32.totalorder %s30, 1
      %s32 = scalar_select %p31, 0, %s30
      %s33 = sadd.s32 1, %s24
      %s34 = scalar_select %p31, %s33, %s24
      %p35 = scmp.ge.s32.totalorder %s34, 2
      %s36 = scalar_select %p35, 0, %s34
      %s37 = ssub.s32 %s24, %s36
      %s38 = ssub.s32 %s25, %s32
      %s39 = sor.u32 %s37, %s38
      %p40 = scmp.eq.s32.totalorder %s39, 0
      %s42 = sadd.s32 %s41, 1
      %s43 = scalar_select %p40, %s41, %s42
      %p46 = pneg %p40
      %p47 = scmp.eq.s32.totalorder %s17, 1
      %p48 = por %p46, %p47
      %p49 = scmp.ne.s32.totalorder %s41, %s44
      %p50 = scmp.eq.s32.totalorder %s17, 0
      %p51 = por %p49, %p50
      %p52 = scmp.ne.s32.totalorder %s41, %s44
      %p53 = scmp.eq.s32.totalorder %s22, 1
      %p54 = por %p52, %p53
      %p55 = scmp.ne.s32.totalorder %s44, %s45
      %p56 = scmp.eq.s32.totalorder %s22, 0
      %p57 = por %p55, %p56
      %p58 = scmp.ne.s32.totalorder %s44, %s45
      %p59 = scmp.eq.s32.totalorder %s23, 1
      %p60 = por %p58, %p59
      %p62 = scmp.ne.s32.totalorder %s45, %s61
      %p63 = scmp.eq.s32.totalorder %s23, 0
      %p64 = por %p62, %p63
      %s66 = sadd.s32 %s65, 1
      %p69 = scmp.eq.s32.totalorder %s17, 1
      %p70 = scmp.ne.s32.totalorder %s65, %s67
      %p71 = scmp.eq.s32.totalorder %s17, 0
      %p72 = por %p70, %p71
      %p73 = scmp.ne.s32.totalorder %s65, %s67
      %p74 = scmp.eq.s32.totalorder %s22, 1
      %p75 = por %p73, %p74
      %p76 = scmp.ne.s32.totalorder %s67, %s68
      %p77 = scmp.eq.s32.totalorder %s22, 0
      %p78 = por %p76, %p77
      %p79 = scmp.ne.s32.totalorder %s67, %s68
      %p80 = scmp.eq.s32.totalorder %s23, 1
      %p81 = por %p79, %p80
      %p83 = scmp.ne.s32.totalorder %s68, %s82
      %p84 = scmp.eq.s32.totalorder %s23, 0
      %p85 = por %p83, %p84
      %s87 = sadd.s32 %s86, 1
      %p90 = scmp.eq.s32.totalorder %s17, 1
      %p91 = scmp.ne.s32.totalorder %s86, %s88
      %p92 = scmp.eq.s32.totalorder %s17, 0
      %p93 = por %p91, %p92
      %p94 = scmp.ne.s32.totalorder %s86, %s88
      %p95 = scmp.eq.s32.totalorder %s22, 1
      %p96 = por %p94, %p95
      %p97 = scmp.ne.s32.totalorder %s88, %s89
      %p98 = scmp.eq.s32.totalorder %s22, 0
      %p99 = por %p97, %p98
      %p100 = scmp.ne.s32.totalorder %s88, %s89
      %p101 = scmp.eq.s32.totalorder %s23, 1
      %p102 = por %p100, %p101
      %p104 = scmp.ne.s32.totalorder %s89, %s103
      %p105 = scmp.eq.s32.totalorder %s23, 0
      %p106 = por %p104, %p105
      %s107 = ssub.s32 %s24, %s36
      %s108 = ssub.s32 %s25, %s32
      %s109 = sor.u32 %s107, %s108
      %p110 = scmp.eq.s32.totalorder %s109, 0
      %s112 = sadd.s32 %s111, 1
      %s113 = scalar_select %p110, %s111, %s112
      %p116 = pneg %p110
      %p117 = scmp.eq.s32.totalorder %s17, 1
      %p118 = por %p116, %p117
      %p119 = scmp.ne.s32.totalorder %s111, %s114
      %p120 = scmp.eq.s32.totalorder %s17, 0
      %p121 = por %p119, %p120
      %p122 = scmp.ne.s32.totalorder %s111, %s114
      %p123 = scmp.eq.s32.totalorder %s22, 1
      %p124 = por %p122, %p123
      %p125 = scmp.ne.s32.totalorder %s114, %s115
      %p126 = scmp.eq.s32.totalorder %s22, 0
      %p127 = por %p125, %p126
      %p128 = scmp.ne.s32.totalorder %s114, %s115
      %p129 = scmp.eq.s32.totalorder %s23, 1
      %p130 = por %p128, %p129
      %p132 = scmp.ne.s32.totalorder %s115, %s131
      %p133 = scmp.eq.s32.totalorder %s23, 0
      %p134 = por %p132, %p133
      %p135 = scmp.le.s32.totalorder 1, %s17
      %p136 = scmp.lt.s32.totalorder %s17, 3
      %p137 = pnand %p135, %p136
      %p138 = pneg %p137
      // Predicated region
      $region9: #{tpu_custom_call.1} parent=5 // pred_check
        _
      $region10: #{tpu_custom_call.1} parent=5 // pred_check_branch
        %140 = sbr.rel (%p137) target = $region12
      $region11: #{tpu_custom_call.1} parent=5 // pred_region
        %s141 = ssub.s32 %s17, 1
        // Predicated region
        $region13: #{tpu_custom_call.1} parent=11 // pred_check
          %p142 = pneg %p78
        $region14: #{tpu_custom_call.1} parent=11 // pred_check_branch
          %144 = sbr.rel (%p142) target = $region16
        $region15: #{tpu_custom_call.1} parent=11 // pred_region
          %s146 = ssub.s32 64, 64
          %147 = vsyncadd [#allocation5], %s146
          %150 = dma.hbm_to_smem %s1, 64, [#allocation7], [#allocation5]
        $region16: #{tpu_custom_call.1} parent=11 // pred_fallthru
          _
        // Predicated region
        $region17: #{tpu_custom_call.1} parent=11 // pred_check
          %p151 = pneg %p99
        $region18: #{tpu_custom_call.1} parent=11 // pred_check_branch
          %153 = sbr.rel (%p151) target = $region20
        $region19: #{tpu_custom_call.1} parent=11 // pred_region
          %s155 = ssub.s32 16, 16
          %156 = vsyncadd [#allocation6], %s155
          %s158 = sshll.u32 %s2, 4
          %s159 = int_to_ptr.vmem [resolvable:$true] %s158
          %161 = dma.vmem_to_smem %s159, 16, [#allocation8], [#allocation6]
        $region20: #{tpu_custom_call.1} parent=11 // pred_fallthru
          _
      $region12: #{tpu_custom_call.1} parent=5 // pred_fallthru
        _
      %p162 = scmp.lt.s32.totalorder %s17, 2
      // Predicated region
      $region21: #{tpu_custom_call.1} parent=5 // pred_check
        %p163 = pneg %p162
      $region22: #{tpu_custom_call.1} parent=5 // pred_check_branch
        %165 = sbr.rel (%p163) target = $region24
      $region23: #{tpu_custom_call.1} parent=5 // pred_region
        // Predicated region
        $region25: #{tpu_custom_call.1} parent=23 // pred_check
          %p166 = pneg %p51
        $region26: #{tpu_custom_call.1} parent=23 // pred_check_branch
          %168 = sbr.rel (%p166) target = $region28
        $region27: #{tpu_custom_call.1} parent=23 // pred_region
          %s169 = sand.u32 %s41, 1
          %s170 = scalar_lea.sflag [#allocation3], %s169
          %s171 = sand.u32 %s41, 1
          %s172 = smul.addr %s171, 8
          %s173 = scalar_lea.vmem [#allocation2], %s172
          %s175 = ssub.s32 128, 128
          %176 = vsyncadd %s170, %s175
          %s177 = smul.addr %s24, 4
          %s178 = sadd.s32 %s25, %s177
          %s179 = smul.addr %s178, 32
          %s180 = scalar_lea.hbm %s0, %s179
          %s181 = sshll.u32 %s173, 4
          %s182 = int_to_ptr.vmem [resolvable:$true] %s181
          %187 = dma.hbm_to_vmem [thread:$0]  %s180, 128, %s182, %s170, 32, 32, 2
        $region28: #{tpu_custom_call.1} parent=23 // pred_fallthru
          _
      $region24: #{tpu_custom_call.1} parent=5 // pred_fallthru
        _
      %p188 = scmp.le.s32.totalorder 1, %s17
      %p189 = scmp.lt.s32.totalorder %s17, 3
      %p190 = pnand %p188, %p189
      %p191 = pneg %p190
      // Predicated region
      $region29: #{tpu_custom_call.1} parent=5 // pred_check
        _
      $region30: #{tpu_custom_call.1} parent=5 // pred_check_branch
        %193 = sbr.rel (%p190) target = $region32
      $region31: #{tpu_custom_call.1} parent=5 // pred_region
        %s194 = ssub.s32 %s17, 1
        %s195 = sand.u32 %s44, 1
        %s196 = scalar_lea.sflag [#allocation3], %s195
        %s197 = sand.u32 %s44, 1
        %s198 = smul.addr %s197, 8
        %s199 = scalar_lea.vmem [#allocation2], %s198
        // Predicated region
        $region33: #{tpu_custom_call.1} parent=31 // pred_check
          %p200 = pneg %p57
        $region34: #{tpu_custom_call.1} parent=31 // pred_check_branch
          %202 = sbr.rel (%p200) target = $region36
        $region35: #{tpu_custom_call.1} parent=31 // pred_region
          %203 = dma.done %s196, 128
        $region36: #{tpu_custom_call.1} parent=31 // pred_fallthru
          _
        // Predicated region
        $region37: #{tpu_custom_call.1} parent=31 // pred_check
          %p204 = pneg %p78
        $region38: #{tpu_custom_call.1} parent=31 // pred_check_branch
          %206 = sbr.rel (%p204) target = $region40
        $region39: #{tpu_custom_call.1} parent=31 // pred_region
          %207 = dma.done [#allocation5], 64
        $region40: #{tpu_custom_call.1} parent=31 // pred_fallthru
          _
        // Predicated region
        $region41: #{tpu_custom_call.1} parent=31 // pred_check
          %p208 = pneg %p99
        $region42: #{tpu_custom_call.1} parent=31 // pred_check_branch
          %210 = sbr.rel (%p208) target = $region44
        $region43: #{tpu_custom_call.1} parent=31 // pred_region
          %211 = dma.done [#allocation6], 16
        $region44: #{tpu_custom_call.1} parent=31 // pred_fallthru
          _
        %212 = sfence
        %s213 = sand.u32 %s44, 1
        %s214 = scalar_lea.sflag [#allocation3], %s213
        %s215 = sand.u32 %s44, 1
        %s216 = smul.addr %s215, 8
        %s217 = scalar_lea.vmem [#allocation2], %s216
        %p218 = pneg %p57
        %p219 = pneg %p54
        %p220 = pneg %p78
        %p221 = pneg %p75
        %p222 = pneg %p99
        %p223 = pneg %p96
        %p224 = pneg %p127
        %p225 = pneg %p124
        %s226 = sand.u32 %s114, 1
        %s227 = scalar_lea.sflag [#allocation4], %s226
        %s228 = sand.u32 %s114, 1
        %s229 = smul.addr %s228, 6
        %s230 = scalar_lea.vmem [#allocation9], %s229
        %v231 = vld [vmem:[%s199] sm:$0x3]
        %s232 = sld [smem:[#allocation7]]
        %v233 = vstv %s232
        %v234 = vmul.f32 %v231, %v233
        %s235 = scalar_lea.vmem %s199, 2 [#allocation2]
        %v236 = vld [vmem:[%s235] sm:$0x3]
        %s237 = sld [smem:[#allocation7 + $0x1]]
        %v238 = vstv %s237
        %v239 = vmul.f32 %v236, %v238
        %v240 = vadd.f32 %v234, %v239
        %s241 = scalar_lea.vmem %s199, 4 [#allocation2]
        %v242 = vld [vmem:[%s241] sm:$0x3]
        %s243 = sld [smem:[#allocation7 + $0x2]]
        %v244 = vstv %s243
        %v245 = vmul.f32 %v242, %v244
        %v246 = vadd.f32 %v240, %v245
        %s247 = scalar_lea.vmem %s199, 6 [#allocation2]
        %v248 = vld [vmem:[%s247] sm:$0x3]
        %s249 = sld [smem:[#allocation7 + $0x3]]
        %v250 = vstv %s249
        %v251 = vmul.f32 %v248, %v250
        %v252 = vadd.f32 %v246, %v251
        %s253 = sld [smem:[#allocation8]]
        %v254 = vstv %s253
        %v255 = vadd.f32 %v252, %v254
        %v256 = vsub.f32 0.0, %v255
        %v257 = vmul.f32 %v256, 1.442695
        %v258 = vpow.pop %v257
        %v259 = vadd.f32 %v258, 1.0
        %v260 = vrcp.pop %v259
        %261 = vst [vmem:[%s230] sm:$0x3] %v260
        %v262 = vld [vmem:[%s199] sm:$0x3]
        %s263 = sld [smem:[#allocation7 + $0x80]]
        %v264 = vstv %s263
        %v265 = vmul.f32 %v262, %v264
        %v266 = vld [vmem:[%s235] sm:$0x3]
        %s267 = sld [smem:[#allocation7 + $0x81]]
        %v268 = vstv %s267
        %v269 = vmul.f32 %v266, %v268
        %v270 = vadd.f32 %v265, %v269
        %v271 = vld [vmem:[%s241] sm:$0x3]
        %s272 = sld [smem:[#allocation7 + $0x82]]
        %v273 = vstv %s272
        %v274 = vmul.f32 %v271, %v273
        %v275 = vadd.f32 %v270, %v274
        %v276 = vld [vmem:[%s247] sm:$0x3]
        %s277 = sld [smem:[#allocation7 + $0x83]]
        %v278 = vstv %s277
        %v279 = vmul.f32 %v276, %v278
        %v280 = vadd.f32 %v275, %v279
        %s281 = sld [smem:[#allocation8 + $0x1]]
        %v282 = vstv %s281
        %v283 = vadd.f32 %v280, %v282
        %v284 = vsub.f32 0.0, %v283
        %v285 = vmul.f32 %v284, 1.442695
        %v286 = vpow.pop %v285
        %v287 = vadd.f32 %v286, 1.0
        %v288 = vrcp.pop %v287
        %s289 = scalar_lea.vmem %s230, 2 [#allocation9]
        %290 = vst [vmem:[%s289] sm:$0x3] %v288
        %v291 = vld [vmem:[%s199] sm:$0x3]
        %s292 = sld [smem:[#allocation7 + $0x100]]
        %v293 = vstv %s292
        %v294 = vmul.f32 %v291, %v293
        %v295 = vld [vmem:[%s235] sm:$0x3]
        %s296 = sld [smem:[#allocation7 + $0x101]]
        %v297 = vstv %s296
        %v298 = vmul.f32 %v295, %v297
        %v299 = vadd.f32 %v294, %v298
        %v300 = vld [vmem:[%s241] sm:$0x3]
        %s301 = sld [smem:[#allocation7 + $0x102]]
        %v302 = vstv %s301
        %v303 = vmul.f32 %v300, %v302
        %v304 = vadd.f32 %v299, %v303
        %v305 = vld [vmem:[%s247] sm:$0x3]
        %s306 = sld [smem:[#allocation7 + $0x103]]
        %v307 = vstv %s306
        %v308 = vmul.f32 %v305, %v307
        %v309 = vadd.f32 %v304, %v308
        %s310 = sld [smem:[#allocation8 + $0x2]]
        %v311 = vstv %s310
        %v312 = vadd.f32 %v309, %v311
        %v313 = vsub.f32 0.0, %v312
        %v314 = vmul.f32 %v313, 1.442695
        %v315 = vpow.pop %v314
        %v316 = vadd.f32 %v315, 1.0
        %v317 = vrcp.pop %v316
        %s318 = scalar_lea.vmem %s230, 4 [#allocation9]
        %319 = vst [vmem:[%s318] sm:$0x3] %v317
        %s320 = sand.u32 %s114, 1
        %s321 = scalar_lea.sflag [#allocation4], %s320
        %s322 = sand.u32 %s114, 1
        %s323 = smul.addr %s322, 6
        %s324 = scalar_lea.vmem [#allocation9], %s323
        // Predicated region
        $region45: #{tpu_custom_call.1} parent=31 // pred_check
          %p325 = pneg %p124
        $region46: #{tpu_custom_call.1} parent=31 // pred_check_branch
          %327 = sbr.rel (%p325) target = $region48
        $region47: #{tpu_custom_call.1} parent=31 // pred_region
          %s329 = ssub.s32 96, 96
          %330 = vsyncadd %s321, %s329
          %s331 = smul.addr %s26, 3
          %s332 = sadd.s32 %s27, %s331
          %s333 = smul.addr %s332, 32
          %s334 = scalar_lea.hbm %s3, %s333
          %s335 = sshll.u32 %s324, 4
          %s336 = int_to_ptr.vmem [resolvable:$true] %s335
          %341 = dma.vmem_to_hbm [thread:$0]  %s336, 96, %s334, %s321, 32, 32, 2
        $region48: #{tpu_custom_call.1} parent=31 // pred_fallthru
          _
      $region32: #{tpu_custom_call.1} parent=5 // pred_fallthru
        _
      %p342 = scmp.le.s32.totalorder 2, %s17
      // Predicated region
      $region49: #{tpu_custom_call.1} parent=5 // pred_check
        %p343 = pneg %p342
      $region50: #{tpu_custom_call.1} parent=5 // pred_check_branch
        %345 = sbr.rel (%p343) target = $region52
      $region51: #{tpu_custom_call.1} parent=5 // pred_region
        %s346 = ssub.s32 %s17, 2
        // Predicated region
        $region53: #{tpu_custom_call.1} parent=51 // pred_check
          %p347 = pneg %p130
        $region54: #{tpu_custom_call.1} parent=51 // pred_check_branch
          %349 = sbr.rel (%p347) target = $region56
        $region55: #{tpu_custom_call.1} parent=51 // pred_region
          %s350 = sand.u32 %s115, 1
          %s351 = scalar_lea.sflag [#allocation4], %s350
          %s352 = sand.u32 %s115, 1
          %s353 = smul.addr %s352, 6
          %s354 = scalar_lea.vmem [#allocation9], %s353
          %355 = dma.done %s351, 96
        $region56: #{tpu_custom_call.1} parent=51 // pred_fallthru
          _
      $region52: #{tpu_custom_call.1} parent=5 // pred_fallthru
        _
    $region6: #{tpu_custom_call.1} parent=1 // loop_footer
      %s21 = sadd.s32 1, %s17
    $region7: #{tpu_custom_call.1} parent=1 // loop_footer_branch
      %16 = sbr.rel target = $region3
    $region8: #{tpu_custom_call.1} parent=1 // loop_exit
      _
    %356 = vsyncpa [#allocation3], 1
    %s357 = scalar_lea.sflag [#allocation3], 1
    %358 = vsyncpa %s357, 1
    %359 = vsyncpa [#allocation4], 1
    %s360 = scalar_lea.sflag [#allocation4], 1
    %361 = vsyncpa %s360, 1
    %362 = vsyncpa [#allocation5], 1
    %s363 = scalar_lea.sflag [#allocation5], 1
    %364 = vsyncpa %s363, 1
    %365 = vsyncpa [#allocation6], 1
    %s366 = scalar_lea.sflag [#allocation6], 1
    %367 = vsyncpa %s366, 1

</llo_original>
